<compile_context>
chip_gen: v7x
topology: tpu7x:2x2x1
jax: 0.10.0
libtpu: 0.0.40
codegen_flags: <defaults>
</compile_context>

<pallas_src>
import math
from functools import partial

import jax
import jax.numpy as jnp
from jax import lax
from jax.experimental import pallas as pl
from jax.experimental.pallas import tpu as pltpu

_EPS = 1e-5
# Scoped-VMEM ceiling requested from Mosaic: above the v5e/v6e/v7x scoped
# defaults (16/32/32 MiB) but comfortably below v7x's 64 MiB physical per-core.
_VMEM_LIMIT_BYTES = 48 * 1024 * 1024
# Working-set budget used by the tile pickers.  Per x-tile element we account
# for double-buffered input + output plus ~3 f32 temporaries materialised in
# the kernel body (f32 cast, centered, pre-cast output).
_TILE_BUDGET_BYTES = 24 * 1024 * 1024


def _max_tile_elems(dtype):
    itemsize = jnp.dtype(dtype).itemsize
    per_elem = 4 * itemsize + 3 * 4
    return max(_TILE_BUDGET_BYTES // per_elem, 8 * 128)


def _prefer_parallel(tiles, B, C):
    """Prefer tiles giving >= 2 grid steps so both v7x TensorCores get work."""
    multi = [t for t in tiles if B * (C // t) >= 2]
    return max(multi) if multi else max(tiles)


def _pick_channel_tile(B, C, HW, dtype):
    """Channel tile for the single-tile channels-major kernel (None -> HW-tile)."""
    cands = [t for t in range(8, C, 8) if C % t == 0] + [C]
    fitting = [t for t in cands if t * HW <= _max_tile_elems(dtype)]
    if not fitting:
        return None
    return _prefer_parallel(fitting, B, C)


def _pick_hw_tiles(C, HW, dtype):
    """(channel_tile, hw_tile) for the HW-tiled path."""
    max_elems = _max_tile_elems(dtype)
    tc = 8 if C % 8 == 0 else C
    thw_cands = [t for t in range(128, HW, 128) if HW % t == 0] + [HW]
    fitting = [t for t in thw_cands if tc * t <= max_elems]
    thw = max(fitting) if fitting else min(thw_cands)
    return tc, thw


# --------------------------------------------------------------------------
# Kernels
# --------------------------------------------------------------------------
def _adain_kernel_chan_major(params_ref, x_ref, o_ref):
    """Whole (TC, HW) row resident.  params_ref: (TC, 2) = [gamma | beta]."""
    xf = x_ref[...].astype(jnp.float32)                             # (TC, HW)
    mean = jnp.mean(xf, axis=-1, keepdims=True)                     # (TC, 1)
    var = jnp.mean(jnp.square(xf - mean), axis=-1, keepdims=True)   # biased, two-pass
    gamma = params_ref[:, 0:1]
    beta = params_ref[:, 1:2]
    scale = gamma * lax.rsqrt(var + jnp.float32(_EPS))              # (TC, 1)
    shift = beta - mean * scale
    o_ref[...] = (xf * scale + shift).astype(o_ref.dtype)


def _adain_kernel_spatial_major(params_ref, x_ref, o_ref):
    """HW < 128 layers: x is (HW, TCL) with channels on lanes; reduce sublanes."""
    xf = x_ref[...].astype(jnp.float32)                             # (HW, TCL)
    mean = jnp.mean(xf, axis=0, keepdims=True)                      # (1, TCL)
    var = jnp.mean(jnp.square(xf - mean), axis=0, keepdims=True)
    gamma = params_ref[0:1, :]
    beta = params_ref[1:2, :]
    scale = gamma * lax.rsqrt(var + jnp.float32(_EPS))
    shift = beta - mean * scale
    o_ref[...] = (xf * scale + shift).astype(o_ref.dtype)


def _adain_stats_kernel(params_ref, x_ref, ss_ref, sum_ref, sq_ref, *, hw):
    """HW-tiled pass 1: accumulate per-channel sum / sum-sq, finalize scale/shift."""
    h = pl.program_id(2)

    @pl.when(h == 0)
    def _():
        sum_ref[...] = jnp.zeros_like(sum_ref)
        sq_ref[...] = jnp.zeros_like(sq_ref)

    xf = x_ref[...].astype(jnp.float32)                             # (TC, THW)
    sum_ref[...] += jnp.sum(xf, axis=-1, keepdims=True)
    sq_ref[...] += jnp.sum(xf * xf, axis=-1, keepdims=True)

    @pl.when(h == pl.num_programs(2) - 1)
    def _():
        inv_n = jnp.float32(1.0 / hw)
        mean = sum_ref[...] * inv_n
        var = jnp.maximum(sq_ref[...] * inv_n - mean * mean, 0.0)
        gamma = params_ref[:, 0:1]
        beta = params_ref[:, 1:2]
        scale = gamma * lax.rsqrt(var + jnp.float32(_EPS))
        ss_ref[:, 0:1] = scale
        ss_ref[:, 1:2] = beta - mean * scale


def _adain_apply_kernel(ss_ref, x_ref, o_ref):
    """HW-tiled pass 2: out = x * scale + shift (per-channel scalars)."""
    xf = x_ref[...].astype(jnp.float32)
    o_ref[...] = (xf * ss_ref[:, 0:1] + ss_ref[:, 1:2]).astype(o_ref.dtype)


# --------------------------------------------------------------------------
# Drivers
# --------------------------------------------------------------------------
def _adain_chan_major(x, gamma, beta, channel_tile, hw_tile):
    B, C, H, W = x.shape
    HW = H * W
    x3 = x.reshape(B, C, HW)                    # lane-dense when HW % 128 == 0
    params = jnp.stack([gamma, beta], axis=-1)  # (B, C, 2): one DMA per tile

    tc = channel_tile if channel_tile is not None else _pick_channel_tile(B, C, HW, x.dtype)
    use_hw_tiling = (hw_tile is not None and hw_tile < HW) or tc is None

    if not use_hw_tiling:
        assert C % tc == 0, "channel tile must divide C"
        out3 = pl.pallas_call(
            _adain_kernel_chan_major,
            out_shape=jax.ShapeDtypeStruct((B, C, HW), x.dtype),
            grid_spec=pltpu.PrefetchScalarGridSpec(
                num_scalar_prefetch=0,
                grid=(B, C // tc),
                in_specs=[
                    pl.BlockSpec((pl.Squeezed(), tc, 2), lambda b, c: (b, c, 0)),
                    pl.BlockSpec((pl.Squeezed(), tc, HW), lambda b, c: (b, c, 0)),
                ],
                out_specs=pl.BlockSpec((pl.Squeezed(), tc, HW), lambda b, c: (b, c, 0)),
            ),
            compiler_params=pltpu.CompilerParams(
                dimension_semantics=("parallel", "parallel"),
                vmem_limit_bytes=_VMEM_LIMIT_BYTES,
            ),
        )(params, x3)
        return out3.reshape(B, C, H, W)

    # --- HW-tiled path (large spatial: a (tc, HW) row does not fit VMEM) ---
    auto_tc, auto_thw = _pick_hw_tiles(C, HW, x.dtype)
    tc = channel_tile if channel_tile is not None else auto_tc
    thw = hw_tile if hw_tile is not None else auto_thw
    assert C % tc == 0 and HW % thw == 0
    n_hw = HW // thw

    # Pass 1: per-(b, c) sum / sum-sq -> fused (scale, shift) packed as (B, C, 2).
    ss = pl.pallas_call(
        partial(_adain_stats_kernel, hw=HW),
        out_shape=jax.ShapeDtypeStruct((B, C, 2), jnp.float32),
        grid_spec=pltpu.PrefetchScalarGridSpec(
            num_scalar_prefetch=0,
            grid=(B, C // tc, n_hw),
            in_specs=[
                pl.BlockSpec((pl.Squeezed(), tc, 2), lambda b, c, h: (b, c, 0)),
                pl.BlockSpec((pl.Squeezed(), tc, thw), lambda b, c, h: (b, c, h)),
            ],
            out_specs=pl.BlockSpec((pl.Squeezed(), tc, 2), lambda b, c, h: (b, c, 0)),
            scratch_shapes=[
                pltpu.VMEM((tc, 1), jnp.float32),
                pltpu.VMEM((tc, 1), jnp.float32),
            ],
        ),
        compiler_params=pltpu.CompilerParams(
            dimension_semantics=("parallel", "parallel", "arbitrary"),
            vmem_limit_bytes=_VMEM_LIMIT_BYTES,
        ),
    )(params, x3)

    # Pass 2: streaming out = x * scale + shift, fully parallel.
    out3 = pl.pallas_call(
        _adain_apply_kernel,
        out_shape=jax.ShapeDtypeStruct((B, C, HW), x.dtype),
        grid_spec=pltpu.PrefetchScalarGridSpec(
            num_scalar_prefetch=0,
            grid=(B, C // tc, n_hw),
            in_specs=[
                pl.BlockSpec((pl.Squeezed(), tc, 2), lambda b, c, h: (b, c, 0)),
                pl.BlockSpec((pl.Squeezed(), tc, thw), lambda b, c, h: (b, c, h)),
            ],
            out_specs=pl.BlockSpec((pl.Squeezed(), tc, thw), lambda b, c, h: (b, c, h)),
        ),
        compiler_params=pltpu.CompilerParams(
            dimension_semantics=("parallel", "parallel", "parallel"),
            vmem_limit_bytes=_VMEM_LIMIT_BYTES,
        ),
    )(ss, x3)
    return out3.reshape(B, C, H, W)


def _adain_spatial_major(x, gamma, beta, channel_tile):
    """Small-resolution layers (HW < 128): channels (multiple of 128) on lanes."""
    B, C, H, W = x.shape
    HW = H * W
    # (B, C, H, W) -> (B, HW, C): lane-dense stores; reduction over sublanes.
    xt = jnp.transpose(x, (0, 2, 3, 1)).reshape(B, HW, C)
    params = jnp.stack([gamma, beta], axis=1)  # (B, 2, C)

    if channel_tile is not None:
        tcl = channel_tile
    else:
        cands = [t for t in range(128, C, 128) if C % t == 0] + [C]
        fitting = [t for t in cands if HW * t <= _max_tile_elems(x.dtype)] or [min(cands)]
        tcl = _prefer_parallel(fitting, B, C)
    assert C % tcl == 0

    out_t = pl.pallas_call(
        _adain_kernel_spatial_major,
        out_shape=jax.ShapeDtypeStruct((B, HW, C), x.dtype),
        grid_spec=pltpu.PrefetchScalarGridSpec(
            num_scalar_prefetch=0,
            grid=(B, C // tcl),
            in_specs=[
                pl.BlockSpec((pl.Squeezed(), 2, tcl), lambda b, c: (b, 0, c)),
                pl.BlockSpec((pl.Squeezed(), HW, tcl), lambda b, c: (b, 0, c)),
            ],
            out_specs=pl.BlockSpec((pl.Squeezed(), HW, tcl), lambda b, c: (b, 0, c)),
        ),
        compiler_params=pltpu.CompilerParams(
            dimension_semantics=("parallel", "parallel"),
            vmem_limit_bytes=_VMEM_LIMIT_BYTES,
        ),
    )(params, xt)
    return jnp.transpose(out_t.reshape(B, H, W, C), (0, 3, 1, 2))


def adaptive_instance_norm(x, style, weight, bias, *, channel_tile=None, hw_tile=None):
    """x: [B, C, H, W]; style: [B, S]; weight: [2C, S] (torch layout); bias: [2C]."""
    B, C, H, W = x.shape
    S = style.shape[1]
    assert weight.shape == (2 * C, S) and bias.shape == (2 * C,)
    HW = H * W

    # EqualLinear hoisted out of the kernel: one (B,S)x(S,2C) XLA gemm.
    w_eff = weight.astype(jnp.float32) * jnp.float32(math.sqrt(2.0 / S))
    st = style.astype(jnp.float32) @ w_eff.T + bias.astype(jnp.float32)   # (B, 2C)
    gamma, beta = st[:, :C], st[:, C:]

    if HW % 128 != 0 and C % 128 == 0 and hw_tile is None:
        # 4x4 / 8x8 StyleGAN layers: keep stores lane-dense via channel lanes.
        return _adain_spatial_major(x, gamma, beta, channel_tile)
    return _adain_chan_major(x, gamma, beta, channel_tile, hw_tile)


def adaptive_instance_norm_ref(x, style, weight, bias):
    """Pure-JAX reference mirroring the PyTorch module."""
    S = style.shape[1]
    C = x.shape[1]
    w_eff = weight * math.sqrt(2.0 / S)
    st = style @ w_eff.T + bias                      # (B, 2C)
    gamma = st[:, :C][:, :, None, None]
    beta = st[:, C:][:, :, None, None]
    mean = jnp.mean(x, axis=(2, 3), keepdims=True)
    var = jnp.mean((x - mean) ** 2, axis=(2, 3), keepdims=True)
    xn = (x - mean) / jnp.sqrt(var + _EPS)
    return gamma * xn + beta


if __name__ == "__main__":
    key = jax.random.PRNGKey(0)

    def make_inputs(k, B, C, H, W, style_dim):
        kx, ks, kw = jax.random.split(k, 3)
        x = jax.random.normal(kx, (B, C, H, W), dtype=jnp.float32)
        style = jax.random.normal(ks, (B, style_dim), dtype=jnp.float32)
        weight = jax.random.normal(kw, (2 * C, style_dim), dtype=jnp.float32)
        bias = jnp.concatenate(
            [jnp.ones((C,), jnp.float32), jnp.zeros((C,), jnp.float32)])
        return x, style, weight, bias

    # Main case (small shapes implied by the module): channels-major path.
    x, style, weight, bias = make_inputs(key, 2, 4, 16, 16, 32)
    out = jax.block_until_ready(adaptive_instance_norm(x, style, weight, bias))
    ref = adaptive_instance_norm_ref(x, style, weight, bias)
    assert out.shape == x.shape and out.dtype == x.dtype
    assert jnp.allclose(out, ref, atol=1e-4, rtol=1e-4), "chan-major mismatch"

    # Small-resolution layer (HW < 128): spatial-major (channel-lane) path.
    x, style, weight, bias = make_inputs(jax.random.fold_in(key, 1), 2, 128, 8, 8, 32)
    out = jax.block_until_ready(adaptive_instance_norm(x, style, weight, bias))
    ref = adaptive_instance_norm_ref(x, style, weight, bias)
    assert jnp.allclose(out, ref, atol=2e-4, rtol=2e-4), "spatial-major mismatch"

    # HW-tiled path (forced small tiles to emulate high-resolution layers).
    x, style, weight, bias = make_inputs(jax.random.fold_in(key, 2), 1, 8, 32, 64, 32)
    out = jax.block_until_ready(
        adaptive_instance_norm(x, style, weight, bias, channel_tile=8, hw_tile=512))
    ref = adaptive_instance_norm_ref(x, style, weight, bias)
    assert jnp.allclose(out, ref, atol=2e-4, rtol=2e-4), "hw-tiled mismatch"

    print("KERNEL_OK")
</pallas_src>

<mosaic_0001>
module attributes {stable_mosaic.version = 11 : i64} {
  func.func @_adain_kernel_chan_major(%arg0: i32, %arg1: i32, %arg2: memref<1x4x2xf32, #tpu.memory_space<vmem>>, %arg3: memref<1x4x256xf32, #tpu.memory_space<vmem>>, %arg4: memref<1x4x256xf32, #tpu.memory_space<vmem>>) attributes {dimension_semantics = [#tpu.dimension_semantics<parallel>, #tpu.dimension_semantics<parallel>], iteration_bounds = array<i64: 2, 1>, scalar_prefetch = 0 : i64, scratch_operands = 0 : i64, tpu.core_type = #tpu.core_type<tc>, window_params = [{transform_indices = @transform_0, window_bounds = array<i64: 1, 4, 2>}, {transform_indices = @transform_1, window_bounds = array<i64: 1, 4, 256>}, {transform_indices = @transform_2, window_bounds = array<i64: 1, 4, 256>}]} {
    %c0 = arith.constant 0 : index
    %c0_0 = arith.constant 0 : index
    %c0_1 = arith.constant 0 : index
    %0 = vector.load %arg3[%c0, %c0_0, %c0_1] : memref<1x4x256xf32, #tpu.memory_space<vmem>>, vector<1x4x256xf32>
    %1 = vector.shape_cast %0 : vector<1x4x256xf32> to vector<4x256xf32>
    %cst = arith.constant dense<0.000000e+00> : vector<4xf32>
    %2 = vector.multi_reduction <add>, %1, %cst [1] : vector<4x256xf32> to vector<4xf32>
    %3 = vector.shape_cast %2 : vector<4xf32> to vector<4x1xf32>
    %cst_2 = arith.constant 2.560000e+02 : f32
    %4 = vector.broadcast %cst_2 : f32 to vector<4x1xf32>
    %5 = arith.divf %3, %4 : vector<4x1xf32>
    %6 = vector.broadcast %5 : vector<4x1xf32> to vector<4x256xf32>
    %7 = arith.subf %1, %6 : vector<4x256xf32>
    %8 = arith.mulf %7, %7 : vector<4x256xf32>
    %cst_3 = arith.constant dense<0.000000e+00> : vector<4xf32>
    %9 = vector.multi_reduction <add>, %8, %cst_3 [1] : vector<4x256xf32> to vector<4xf32>
    %10 = vector.shape_cast %9 : vector<4xf32> to vector<4x1xf32>
    %cst_4 = arith.constant 2.560000e+02 : f32
    %11 = vector.broadcast %cst_4 : f32 to vector<4x1xf32>
    %12 = arith.divf %10, %11 : vector<4x1xf32>
    %c0_5 = arith.constant 0 : index
    %c0_6 = arith.constant 0 : index
    %c0_7 = arith.constant 0 : index
    %13 = vector.load %arg2[%c0_5, %c0_6, %c0_7] : memref<1x4x2xf32, #tpu.memory_space<vmem>>, vector<1x4x1xf32>
    %14 = vector.shape_cast %13 : vector<1x4x1xf32> to vector<4x1xf32>
    %c0_8 = arith.constant 0 : index
    %c0_9 = arith.constant 0 : index
    %c1 = arith.constant 1 : index
    %15 = vector.load %arg2[%c0_8, %c0_9, %c1] : memref<1x4x2xf32, #tpu.memory_space<vmem>>, vector<1x4x1xf32>
    %16 = vector.shape_cast %15 : vector<1x4x1xf32> to vector<4x1xf32>
    %cst_10 = arith.constant 9.99999974E-6 : f32
    %17 = vector.broadcast %cst_10 : f32 to vector<4x1xf32>
    %18 = arith.addf %12, %17 : vector<4x1xf32>
    %19 = math.rsqrt %18 : vector<4x1xf32>
    %20 = arith.mulf %14, %19 : vector<4x1xf32>
    %21 = arith.mulf %5, %20 : vector<4x1xf32>
    %22 = arith.subf %16, %21 : vector<4x1xf32>
    %23 = vector.broadcast %20 : vector<4x1xf32> to vector<4x256xf32>
    %24 = arith.mulf %1, %23 : vector<4x256xf32>
    %25 = vector.broadcast %22 : vector<4x1xf32> to vector<4x256xf32>
    %26 = arith.addf %24, %25 : vector<4x256xf32>
    %c0_11 = arith.constant 0 : index
    %c0_12 = arith.constant 0 : index
    %c0_13 = arith.constant 0 : index
    %27 = vector.load %arg4[%c0_11, %c0_12, %c0_13] : memref<1x4x256xf32, #tpu.memory_space<vmem>>, vector<1x4x256xf32>
    %28 = vector.shape_cast %27 : vector<1x4x256xf32> to vector<4x256xf32>
    %29 = vector.shape_cast %26 : vector<4x256xf32> to vector<1x4x256xf32>
    tpu.vector_store %arg4[%c0_11, %c0_12, %c0_13], %29 {strides = array<i32>} : memref<1x4x256xf32, #tpu.memory_space<vmem>>, vector<1x4x256xf32>,
    return
  }
  func.func @transform_0(%arg0: i32, %arg1: i32) -> (i32, i32, i32) {
    %c0_i32 = arith.constant 0 : i32
    %c0_i32_0 = arith.constant 0 : i32
    return %arg0, %arg1, %c0_i32 : i32, i32, i32
  }
  func.func @transform_1(%arg0: i32, %arg1: i32) -> (i32, i32, i32) {
    %c0_i32 = arith.constant 0 : i32
    %c0_i32_0 = arith.constant 0 : i32
    return %arg0, %arg1, %c0_i32 : i32, i32, i32
  }
  func.func @transform_2(%arg0: i32, %arg1: i32) -> (i32, i32, i32) {
    %c0_i32 = arith.constant 0 : i32
    %c0_i32_0 = arith.constant 0 : i32
    return %arg0, %arg1, %c0_i32 : i32, i32, i32
  }
}

</mosaic_0001>

<llo_original>
// kernel: tpu_custom_call.1
$region0: #{tpu_custom_call.1}
  #allocation0 [shape = 'u32[]', space=smem, size = 0x4, offset = 0x4, fixed_abs, tag = 'smem constant byte address 0x4 - core index']
  #allocation1 [shape = 'u32[144,128]{1,0:T(1,128)}', space=vmem, size = 0x12000, scoped, tag = 'internal scratch']
  %s0 = inlined_call_operand.vmem [shape: f32[2,4,2], index: 0, kind: input, shape index: {}]
  %s1 = inlined_call_operand.hbm [shape: f32[2,4,256], index: 1, kind: input, shape index: {}]
  %s2 = inlined_call_operand.hbm [shape: f32[2,4,256], index: 2, kind: output, shape index: {}]
  %s3 = sld [smem:[#allocation0]]
  $region45: #{tpu_custom_call.1} parent=0
    _
  %s5 = ssub.s32 1, %s3
  %s6 = scalar_select 0, %s5, %s3
  $region1: #{tpu_custom_call.1} parent=0
    #allocation2 [shape = 'u8[8192]{0}', space=vmem, size = 0x2000, scoped, tag = 'input window, operand 1']
    #allocation3 [shape = 's32[2]{0}', space=sflag, size = 0x8, scoped, tag = 'scoped memory for tpu_custom_call.1']
    #allocation4 [shape = 's32[2]{0}', space=sflag, size = 0x8, scoped, tag = 'scoped memory for tpu_custom_call.1']
    #allocation5 [shape = 'u8[8192]{0}', space=vmem, size = 0x2000, scoped, tag = 'output window, operand 0']
    %7 = vsyncpa [#allocation3], 0
    %s8 = scalar_lea.sflag [#allocation3], 1
    %9 = vsyncpa %s8, 0
    %10 = vsyncpa [#allocation4], 0
    %s11 = scalar_lea.sflag [#allocation4], 1
    %12 = vsyncpa %s11, 0
    loop: start=0, step=1, limit=4
    $region2: #{tpu_custom_call.1} parent=1 // loop_pre_header
      _
    $region3: #{tpu_custom_call.1} parent=1 // loop_header
      %s14 = sphi 0, %s18
      %p15 = scmp.ge.s32.totalorder %s14, 4
      %s21 = sphi 0, %s33
      %s22 = sphi 0, %s29
      %s23 = sphi 0, %s21
      %s24 = sphi 0, %s22
      %s25 = sphi 0, %s23
      %s26 = sphi 0, %s24
      %s38 = sphi 0, %s40
      %s41 = sphi 0, %s38
      %s42 = sphi 0, %s41
      %s58 = sphi 0, %s42
      %s66 = sphi 0, %s68
      %s69 = sphi 0, %s66
      %s70 = sphi 0, %s69
      %s86 = sphi 0, %s70
      %s94 = sphi 0, %s96
      %s97 = sphi 0, %s94
      %s98 = sphi 0, %s97
      %s114 = sphi 0, %s98
    $region4: #{tpu_custom_call.1} parent=1 // loop_header_branch
      %17 = sbr.rel (%p15) target = $region8
    $region5: #{tpu_custom_call.1} parent=1 // loop_body
      %s19 = ssub.s32 %s14, 1
      %s20 = ssub.s32 %s14, 2
      %s27 = sadd.s32 1, %s22
      %p28 = scmp.ge.s32.totalorder %s27, 1
      %s29 = scalar_select %p28, 0, %s27
      %s30 = sadd.s32 1, %s21
      %s31 = scalar_select %p28, %s30, %s21
      %p32 = scmp.ge.s32.totalorder %s31, 2
      %s33 = scalar_select %p32, 0, %s31
      %s34 = ssub.s32 %s21, %s33
      %s35 = ssub.s32 %s22, %s29
      %s36 = sor.u32 %s34, %s35
      %p37 = scmp.eq.s32.totalorder %s36, 0
      %s39 = sadd.s32 %s38, 1
      %s40 = scalar_select %p37, %s38, %s39
      %p43 = pneg %p37
      %p44 = scmp.eq.s32.totalorder %s14, 1
      %p45 = por %p43, %p44
      %p46 = scmp.ne.s32.totalorder %s38, %s41
      %p47 = scmp.eq.s32.totalorder %s14, 0
      %p48 = por %p46, %p47
      %p49 = scmp.ne.s32.totalorder %s38, %s41
      %p50 = scmp.eq.s32.totalorder %s19, 1
      %p51 = por %p49, %p50
      %p52 = scmp.ne.s32.totalorder %s41, %s42
      %p53 = scmp.eq.s32.totalorder %s19, 0
      %p54 = por %p52, %p53
      %p55 = scmp.ne.s32.totalorder %s41, %s42
      %p56 = scmp.eq.s32.totalorder %s20, 1
      %p57 = por %p55, %p56
      %p59 = scmp.ne.s32.totalorder %s42, %s58
      %p60 = scmp.eq.s32.totalorder %s20, 0
      %p61 = por %p59, %p60
      %s62 = ssub.s32 %s21, %s33
      %s63 = ssub.s32 %s22, %s29
      %s64 = sor.u32 %s62, %s63
      %p65 = scmp.eq.s32.totalorder %s64, 0
      %s67 = sadd.s32 %s66, 1
      %s68 = scalar_select %p65, %s66, %s67
      %p71 = pneg %p65
      %p72 = scmp.eq.s32.totalorder %s14, 1
      %p73 = por %p71, %p72
      %p74 = scmp.ne.s32.totalorder %s66, %s69
      %p75 = scmp.eq.s32.totalorder %s14, 0
      %p76 = por %p74, %p75
      %p77 = scmp.ne.s32.totalorder %s66, %s69
      %p78 = scmp.eq.s32.totalorder %s19, 1
      %p79 = por %p77, %p78
      %p80 = scmp.ne.s32.totalorder %s69, %s70
      %p81 = scmp.eq.s32.totalorder %s19, 0
      %p82 = por %p80, %p81
      %p83 = scmp.ne.s32.totalorder %s69, %s70
      %p84 = scmp.eq.s32.totalorder %s20, 1
      %p85 = por %p83, %p84
      %p87 = scmp.ne.s32.totalorder %s70, %s86
      %p88 = scmp.eq.s32.totalorder %s20, 0
      %p89 = por %p87, %p88
      %s90 = ssub.s32 %s21, %s33
      %s91 = ssub.s32 %s22, %s29
      %s92 = sor.u32 %s90, %s91
      %p93 = scmp.eq.s32.totalorder %s92, 0
      %s95 = sadd.s32 %s94, 1
      %s96 = scalar_select %p93, %s94, %s95
      %p99 = pneg %p93
      %p100 = scmp.eq.s32.totalorder %s14, 1
      %p101 = por %p99, %p100
      %p102 = scmp.ne.s32.totalorder %s94, %s97
      %p103 = scmp.eq.s32.totalorder %s14, 0
      %p104 = por %p102, %p103
      %p105 = scmp.ne.s32.totalorder %s94, %s97
      %p106 = scmp.eq.s32.totalorder %s19, 1
      %p107 = por %p105, %p106
      %p108 = scmp.ne.s32.totalorder %s97, %s98
      %p109 = scmp.eq.s32.totalorder %s19, 0
      %p110 = por %p108, %p109
      %p111 = scmp.ne.s32.totalorder %s97, %s98
      %p112 = scmp.eq.s32.totalorder %s20, 1
      %p113 = por %p111, %p112
      %p115 = scmp.ne.s32.totalorder %s98, %s114
      %p116 = scmp.eq.s32.totalorder %s20, 0
      %p117 = por %p115, %p116
      %p118 = scmp.le.s32.totalorder 1, %s14
      %p119 = scmp.lt.s32.totalorder %s14, 3
      %p120 = pnand %p118, %p119
      %p121 = pneg %p120
      // Predicated region
      $region9: #{tpu_custom_call.1} parent=5 // pred_check
        _
      $region10: #{tpu_custom_call.1} parent=5 // pred_check_branch
        %123 = sbr.rel (%p120) target = $region12
      $region11: #{tpu_custom_call.1} parent=5 // pred_region
        %s124 = ssub.s32 %s14, 1
      $region12: #{tpu_custom_call.1} parent=5 // pred_fallthru
        _
      %p125 = scmp.lt.s32.totalorder %s14, 2
      // Predicated region
      $region13: #{tpu_custom_call.1} parent=5 // pred_check
        %p126 = pneg %p125
      $region14: #{tpu_custom_call.1} parent=5 // pred_check_branch
        %128 = sbr.rel (%p126) target = $region16
      $region15: #{tpu_custom_call.1} parent=5 // pred_region
        // Predicated region
        $region17: #{tpu_custom_call.1} parent=15 // pred_check
          %p129 = pneg %p48
        $region18: #{tpu_custom_call.1} parent=15 // pred_check_branch
          %131 = sbr.rel (%p129) target = $region20
        $region19: #{tpu_custom_call.1} parent=15 // pred_region
          %p132 = scmp.lt.s32.totalorder %s21, 1
          %s133 = scalar_select %p132, %s21, 1
          %p134 = scmp.lt.s32.totalorder %s22, 0
          %s135 = scalar_select %p134, %s22, 0
          %s136 = sadd.s32 %s135, %s133
          %s137 = smul.addr %s136, 4
          %s138 = scalar_lea.vmem %s0, %s137
        $region20: #{tpu_custom_call.1} parent=15 // pred_fallthru
          _
        // Predicated region
        $region21: #{tpu_custom_call.1} parent=15 // pred_check
          %p139 = pneg %p76
        $region22: #{tpu_custom_call.1} parent=15 // pred_check_branch
          %141 = sbr.rel (%p139) target = $region24
        $region23: #{tpu_custom_call.1} parent=15 // pred_region
          %s142 = sand.u32 %s66, 1
          %s143 = scalar_lea.sflag [#allocation3], %s142
          %s144 = sand.u32 %s66, 1
          %s145 = smul.addr %s144, 8
          %s146 = scalar_lea.vmem [#allocation2], %s145
          %s148 = ssub.s32 128, 128
          %149 = vsyncadd %s143, %s148
          %s150 = smul.addr %s22, 2
          %s151 = smul.addr %s21, 2
          %s152 = sadd.s32 %s150, %s151
          %s153 = smul.addr %s152, 64
          %s154 = scalar_lea.hbm %s1, %s153
          %s156 = sshll.u32 %s146, 4
          %s157 = int_to_ptr.vmem [resolvable:$true] %s156
          %159 = dma.hbm_to_vmem [thread:$0]  %s154, 128, %s157, %s143
        $region24: #{tpu_custom_call.1} parent=15 // pred_fallthru
          _
      $region16: #{tpu_custom_call.1} parent=5 // pred_fallthru
        _
      %p160 = scmp.le.s32.totalorder 1, %s14
      %p161 = scmp.lt.s32.totalorder %s14, 3
      %p162 = pnand %p160, %p161
      %p163 = pneg %p162
      // Predicated region
      $region25: #{tpu_custom_call.1} parent=5 // pred_check
        _
      $region26: #{tpu_custom_call.1} parent=5 // pred_check_branch
        %165 = sbr.rel (%p162) target = $region28
      $region27: #{tpu_custom_call.1} parent=5 // pred_region
        %s166 = ssub.s32 %s14, 1
        %s167 = sand.u32 %s69, 1
        %s168 = scalar_lea.sflag [#allocation3], %s167
        %s169 = sand.u32 %s69, 1
        %s170 = smul.addr %s169, 8
        %s171 = scalar_lea.vmem [#allocation2], %s170
        // Predicated region
        $region29: #{tpu_custom_call.1} parent=27 // pred_check
          %p172 = pneg %p82
        $region30: #{tpu_custom_call.1} parent=27 // pred_check_branch
          %174 = sbr.rel (%p172) target = $region32
        $region31: #{tpu_custom_call.1} parent=27 // pred_region
          %175 = dma.done %s168, 128
        $region32: #{tpu_custom_call.1} parent=27 // pred_fallthru
          _
        %p176 = scmp.lt.s32.totalorder %s23, 1
        %s177 = scalar_select %p176, %s23, 1
        %p178 = scmp.lt.s32.totalorder %s24, 0
        %s179 = scalar_select %p178, %s24, 0
        %s180 = sadd.s32 %s179, %s177
        %s181 = smul.addr %s180, 4
        %s182 = scalar_lea.vmem %s0, %s181
        %p183 = pneg %p54
        %p184 = pneg %p51
        %s185 = sand.u32 %s69, 1
        %s186 = scalar_lea.sflag [#allocation3], %s185
        %s187 = sand.u32 %s69, 1
        %s188 = smul.addr %s187, 8
        %s189 = scalar_lea.vmem [#allocation2], %s188
        %p190 = pneg %p82
        %p191 = pneg %p79
        %p192 = pneg %p110
        %p193 = pneg %p107
        %s194 = sand.u32 %s97, 1
        %s195 = scalar_lea.sflag [#allocation4], %s194
        %s196 = sand.u32 %s97, 1
        %s197 = smul.addr %s196, 8
        %s198 = scalar_lea.vmem [#allocation5], %s197
        %p199 = scmp.lt.s32.totalorder %s23, 1
        %s200 = scalar_select %p199, %s23, 1
        %p201 = scmp.lt.s32.totalorder %s24, 0
        %s202 = scalar_select %p201, %s24, 0
        %s203 = sadd.s32 %s202, %s200
        %s204 = smul.addr %s203, 4
        %s205 = scalar_lea.vmem %s0, %s204
        %v206 = vld [vmem:[%s171] sm:$0xff]
        %v208 = vcombine.high %v206, %v206
        %vm210 = vcmask 1043456
        %v211 = vsel %vm210, %v206, 0.0
        %v212 = vsel %vm210, %v208, 0.0
        %v213 = vadd.f32 %v211, %v212
        %214 = vadd.xlane.f32.xlu0 %v213
        %v215 = vpop.xlane.xlu0 %214
        %v216 = vrcp.pop 256.0
        %v217 = vmul.f32 %v215, %v216
        %v220 = vunpack.c.l.s4 839922192
        %v221 = vunpack.c.0.s8 %v220
        %v222 = vlaneseq
        %v223 = vshrl.u32 %v222, 7
        %v224 = vsub.s32 %v221, %v223
        %v225 = vrot.slane %v217, %v224
        %v227 = vsub.f32 %v206, %v225
        %v228 = vmul.f32 %v227, %v227
        %v230 = vcombine.high %v228, %v228
        %v232 = vsel %vm210, %v228, 0.0
        %v233 = vsel %vm210, %v230, 0.0
        %v234 = vadd.f32 %v232, %v233
        %235 = vadd.xlane.f32.xlu0 %v234
        %v236 = vpop.xlane.xlu0 %235
        %v237 = vmul.f32 %v236, %v216
        %v238 = vld [vmem:[%s205] sm:$0xf]
        %v239 = vadd.f32 %v237, 1e-05
        %v240 = vrsqrt.pop %v239
        %v241 = vmul.f32 %v238, %v240
        %v242 = vmul.f32 %v217, %v241
        %244 = vrot.lane.b32.xlu0 %v242, 1
        %v245 = vpop.permute.xlu0 %244
        %v247 = vsub.f32 %v238, %v245
        %249 = vset.pattern.permute.xlu0 0
        %250 = vperm.xlu0 %249, %v241
        %v251 = vpop.permute.xlu0 %250
        %v253 = vunpack.c.l.s4 839922192
        %v254 = vunpack.c.0.s8 %v253
        %v255 = vlaneseq
        %v256 = vshrl.u32 %v255, 7
        %v257 = vsub.s32 %v254, %v256
        %v258 = vrot.slane %v251, %v257
        %v260 = vmul.f32 %v206, %v258
        %262 = vset.pattern.permute.xlu0 1
        %263 = vperm.xlu0 %262, %v247
        %v264 = vpop.permute.xlu0 %263
        %v266 = vunpack.c.l.s4 839922192
        %v267 = vunpack.c.0.s8 %v266
        %v268 = vlaneseq
        %v269 = vshrl.u32 %v268, 7
        %v270 = vsub.s32 %v267, %v269
        %v271 = vrot.slane %v264, %v270
        %v273 = vadd.f32 %v260, %v271
        %274 = vst [vmem:[%s198] sm:$0xff] %v273
        %s275 = sand.u32 %s97, 1
        %s276 = scalar_lea.sflag [#allocation4], %s275
        %s277 = sand.u32 %s97, 1
        %s278 = smul.addr %s277, 8
        %s279 = scalar_lea.vmem [#allocation5], %s278
        // Predicated region
        $region33: #{tpu_custom_call.1} parent=27 // pred_check
          %p280 = pneg %p107
        $region34: #{tpu_custom_call.1} parent=27 // pred_check_branch
          %282 = sbr.rel (%p280) target = $region36
        $region35: #{tpu_custom_call.1} parent=27 // pred_region
          %s284 = ssub.s32 128, 128
          %285 = vsyncadd %s276, %s284
          %s286 = smul.addr %s24, 2
          %s287 = smul.addr %s23, 2
          %s288 = sadd.s32 %s286, %s287
          %s289 = smul.addr %s288, 64
          %s290 = scalar_lea.hbm %s2, %s289
          %s292 = sshll.u32 %s279, 4
          %s293 = int_to_ptr.vmem [resolvable:$true] %s292
          %295 = dma.vmem_to_hbm [thread:$0]  %s293, 128, %s290, %s276
        $region36: #{tpu_custom_call.1} parent=27 // pred_fallthru
          _
      $region28: #{tpu_custom_call.1} parent=5 // pred_fallthru
        _
      %p296 = scmp.le.s32.totalorder 2, %s14
      // Predicated region
      $region37: #{tpu_custom_call.1} parent=5 // pred_check
        %p297 = pneg %p296
      $region38: #{tpu_custom_call.1} parent=5 // pred_check_branch
        %299 = sbr.rel (%p297) target = $region40
      $region39: #{tpu_custom_call.1} parent=5 // pred_region
        %s300 = ssub.s32 %s14, 2
        // Predicated region
        $region41: #{tpu_custom_call.1} parent=39 // pred_check
          %p301 = pneg %p113
        $region42: #{tpu_custom_call.1} parent=39 // pred_check_branch
          %303 = sbr.rel (%p301) target = $region44
        $region43: #{tpu_custom_call.1} parent=39 // pred_region
          %s304 = sand.u32 %s98, 1
          %s305 = scalar_lea.sflag [#allocation4], %s304
          %s306 = sand.u32 %s98, 1
          %s307 = smul.addr %s306, 8
          %s308 = scalar_lea.vmem [#allocation5], %s307
          %309 = dma.done %s305, 128
        $region44: #{tpu_custom_call.1} parent=39 // pred_fallthru
          _
      $region40: #{tpu_custom_call.1} parent=5 // pred_fallthru
        _
    $region6: #{tpu_custom_call.1} parent=1 // loop_footer
      %s18 = sadd.s32 1, %s14
    $region7: #{tpu_custom_call.1} parent=1 // loop_footer_branch
      %13 = sbr.rel target = $region3
    $region8: #{tpu_custom_call.1} parent=1 // loop_exit
      _
    %310 = vsyncpa [#allocation3], 1
    %s311 = scalar_lea.sflag [#allocation3], 1
    %312 = vsyncpa %s311, 1
    %313 = vsyncpa [#allocation4], 1
    %s314 = scalar_lea.sflag [#allocation4], 1
    %315 = vsyncpa %s314, 1

</llo_original>
